<compile_context>
chip_gen: v7x
topology: tpu7x:2x2x1
jax: 0.10.0
libtpu: 0.0.40
codegen_flags: <defaults>
</compile_context>

<pallas_src>
import functools

import jax
import jax.numpy as jnp
from jax.experimental import pallas as pl
from jax.experimental.pallas import tpu as pltpu

_LANES = 128
_TARGET_TILE_BYTES = 2 << 20   # ~2 MiB per block (4x with in+out double-buffer)
_SINGLE_BLOCK_BYTES = 1 << 20  # below this, a single block is cheapest


def _heaviside_kernel(x_ref, o_ref):
    x = x_ref[...]
    o_ref[...] = (x >= 0).astype(o_ref.dtype)


def _primitive_kernel(x_ref, o_ref, *, alpha):
    x = x_ref[...]
    inv_alpha = 1.0 / alpha
    abs_x = jnp.abs(x)
    mask0 = (x > inv_alpha).astype(x.dtype)
    mask1 = (abs_x <= inv_alpha).astype(x.dtype)
    # x^2 * sign(x) == x * |x|  (abs_x already computed above)
    poly = (-(alpha * alpha) * 0.5) * (x * abs_x) + alpha * x + 0.5
    o_ref[...] = (mask0 + mask1 * poly).astype(o_ref.dtype)


def _sublane_granularity(dtype):
    # f32 -> 8, bf16/f16 -> 16, int8/fp8 -> 32 rows per vreg tile.
    return 32 // jnp.dtype(dtype).itemsize


def _choose_row_block(rows, width, itemsize, sub):
    total_bytes = rows * width * itemsize
    if total_bytes <= _SINGLE_BLOCK_BYTES or rows <= sub:
        # Block == full array dims is always a legal block shape, even when
        # `rows` is not sublane-aligned.
        return rows
    # Fixed large tile, aligned to the dtype's sublane granularity.
    target_rows = max(sub, (_TARGET_TILE_BYTES // (width * itemsize)) // sub * sub)
    # Keep >= ~8 grid steps so v7x's two TensorCores each get >= 4 steps.
    split_rows = max(sub, ((pl.cdiv(rows, 8) + sub - 1) // sub) * sub)
    return min(target_rows, split_rows)


def _run_elementwise(kernel, x2d):
    rows, width = x2d.shape
    itemsize = jnp.dtype(x2d.dtype).itemsize
    sub = _sublane_granularity(x2d.dtype)
    row_block = _choose_row_block(rows, width, itemsize, sub)
    grid = (pl.cdiv(rows, row_block),)
    # TODO(synk): optionally sweep pipeline_mode=pl.Buffered(3) on very large
    # inputs; default double-buffering is kept here.
    return pl.pallas_call(
        kernel,
        out_shape=jax.ShapeDtypeStruct((rows, width), x2d.dtype),
        grid=grid,
        in_specs=[pl.BlockSpec((row_block, width), lambda i: (i, 0))],
        out_specs=pl.BlockSpec((row_block, width), lambda i: (i, 0)),
        compiler_params=pltpu.CompilerParams(
            dimension_semantics=("parallel",)
        ),
    )(x2d)


def piecewise_quadratic_forward(x, alpha=1.0, spiking=True):
    """Pallas implementation of PiecewiseQuadratic.forward (any shape)."""
    orig_shape = x.shape
    n = x.size
    if n == 0:
        return x

    if spiking:
        kernel = _heaviside_kernel
    else:
        kernel = functools.partial(_primitive_kernel, alpha=float(alpha))

    # Widest lane-dense width that exactly divides numel -> free contiguous
    # reshape in and out, zero extra HBM copies around the kernel.
    width = next((w for w in (1024, 512, 256, _LANES) if n % w == 0), 0)
    if width:
        out2d = _run_elementwise(kernel, x.reshape(n // width, width))
        return out2d.reshape(orig_shape)

    # Rare fallback: numel not a multiple of 128 -> minimal pad to 128 lanes.
    n_pad = pl.cdiv(n, _LANES) * _LANES
    flat = jnp.pad(jnp.ravel(x), (0, n_pad - n))
    out2d = _run_elementwise(kernel, flat.reshape(n_pad // _LANES, _LANES))
    return out2d.reshape(-1)[:n].reshape(orig_shape)


# --- pure-JAX references for correctness checking ---
def _ref_heaviside(x):
    return (x >= 0).astype(x.dtype)


def _ref_primitive(x, alpha):
    inv_alpha = 1.0 / alpha
    mask0 = (x > inv_alpha).astype(x.dtype)
    mask1 = (jnp.abs(x) <= inv_alpha).astype(x.dtype)
    return mask0 + mask1 * (
        -(alpha ** 2) / 2.0 * jnp.square(x) * jnp.sign(x) + alpha * x + 0.5
    )


def _check(x, alpha):
    y_spike = jax.block_until_ready(
        piecewise_quadratic_forward(x, alpha=alpha, spiking=True))
    assert y_spike.shape == x.shape and y_spike.dtype == x.dtype
    assert jnp.allclose(y_spike, _ref_heaviside(x)), "heaviside mismatch"

    y_prim = jax.block_until_ready(
        piecewise_quadratic_forward(x, alpha=alpha, spiking=False))
    assert y_prim.shape == x.shape and y_prim.dtype == x.dtype
    assert jnp.allclose(y_prim, _ref_primitive(x, alpha), atol=1e-6, rtol=1e-6), \
        "primitive mismatch"


if __name__ == "__main__":
    alpha = 1.0

    # NCHW membrane potentials, typical SNN conv-layer shape (no-pad fast path).
    x = jax.random.normal(jax.random.PRNGKey(0), (2, 4, 16, 16),
                          dtype=jnp.float32) * 2.0
    _check(x, alpha)

    # Odd-sized input exercising the rare pad fallback path.
    x_odd = jax.random.normal(jax.random.PRNGKey(1), (3, 5, 7, 11),
                              dtype=jnp.float32) * 2.0
    _check(x_odd, alpha)

    print("KERNEL_OK")
</pallas_src>

<mosaic_0001>
module attributes {stable_mosaic.version = 11 : i64} {
  func.func @_heaviside_kernel(%arg0: i32, %arg1: memref<2x1024xf32, #tpu.memory_space<vmem>>, %arg2: memref<2x1024xf32, #tpu.memory_space<vmem>>) attributes {dimension_semantics = [#tpu.dimension_semantics<parallel>], iteration_bounds = array<i64: 1>, scalar_prefetch = 0 : i64, scratch_operands = 0 : i64, tpu.core_type = #tpu.core_type<tc>, window_params = [{transform_indices = @transform_0, window_bounds = array<i64: 2, 1024>}, {transform_indices = @transform_1, window_bounds = array<i64: 2, 1024>}]} {
    %c0 = arith.constant 0 : index
    %c0_0 = arith.constant 0 : index
    %0 = vector.load %arg1[%c0, %c0_0] : memref<2x1024xf32, #tpu.memory_space<vmem>>, vector<2x1024xf32>
    %cst = arith.constant 0.000000e+00 : f32
    %1 = vector.broadcast %cst : f32 to vector<2x1024xf32>
    %2 = arith.cmpf oge, %0, %1 : vector<2x1024xf32>
    %3 = arith.extui %2 : vector<2x1024xi1> to vector<2x1024xi32>
    %4 = arith.sitofp %3 : vector<2x1024xi32> to vector<2x1024xf32>
    %c0_1 = arith.constant 0 : index
    %c0_2 = arith.constant 0 : index
    %5 = vector.load %arg2[%c0_1, %c0_2] : memref<2x1024xf32, #tpu.memory_space<vmem>>, vector<2x1024xf32>
    tpu.vector_store %arg2[%c0_1, %c0_2], %4 {strides = array<i32>} : memref<2x1024xf32, #tpu.memory_space<vmem>>, vector<2x1024xf32>,
    return
  }
  func.func @transform_0(%arg0: i32) -> (i32, i32) {
    %c0_i32 = arith.constant 0 : i32
    %c0_i32_0 = arith.constant 0 : i32
    return %arg0, %c0_i32 : i32, i32
  }
  func.func @transform_1(%arg0: i32) -> (i32, i32) {
    %c0_i32 = arith.constant 0 : i32
    %c0_i32_0 = arith.constant 0 : i32
    return %arg0, %c0_i32 : i32, i32
  }
}

</mosaic_0001>

<llo_original>
// kernel: tpu_custom_call.1
$region0: #{tpu_custom_call.1}
  #allocation0 [shape = 'u32[]', space=smem, size = 0x4, offset = 0x4, fixed_abs, tag = 'smem constant byte address 0x4 - core index']
  #allocation1 [shape = 'u32[144,128]{1,0:T(1,128)}', space=vmem, size = 0x12000, scoped, tag = 'internal scratch']
  %s0 = inlined_call_operand.hbm [shape: f32[2,1024], index: 0, kind: input, shape index: {}]
  %s1 = inlined_call_operand.hbm [shape: f32[2,1024], index: 1, kind: output, shape index: {}]
  %s2 = sld [smem:[#allocation0]]
  $region18: #{tpu_custom_call.1} parent=0
    _
  %s4 = ssub.s32 1, %s2
  %s5 = scalar_select 0, %s4, %s2
  $region1: #{tpu_custom_call.1} parent=0
    #allocation2 [shape = 'u8[8192]{0}', space=vmem, size = 0x2000, scoped, tag = 'input window, operand 0, single buffered']
    #allocation3 [shape = 's32[1]{0}', space=sflag, size = 0x4, scoped, tag = 'scoped memory for tpu_custom_call.1']
    #allocation4 [shape = 's32[1]{0}', space=sflag, size = 0x4, scoped, tag = 'scoped memory for tpu_custom_call.1']
    #allocation5 [shape = 'u8[8192]{0}', space=vmem, size = 0x2000, scoped, tag = 'output window, operand 0, single buffered']
    %6 = vsyncpa [#allocation3], 0
    %7 = vsyncpa [#allocation4], 0
    // Predicated region
    $region2: #{tpu_custom_call.1} parent=1 // pred_check
      _
    $region3: #{tpu_custom_call.1} parent=1 // pred_check_branch
      %9 = sbr.rel (0) target = $region5
    $region4: #{tpu_custom_call.1} parent=1 // pred_region
      %s11 = ssub.s32 256, 256
      %12 = vsyncadd [#allocation3], %s11
      %s14 = sshll.u32 [#allocation2], 4
      %s15 = int_to_ptr.vmem [resolvable:$true] %s14
      %17 = dma.hbm_to_vmem [thread:$0]  %s0, 256, %s15, [#allocation3]
    $region5: #{tpu_custom_call.1} parent=1 // pred_fallthru
      _
    // Predicated region
    $region6: #{tpu_custom_call.1} parent=1 // pred_check
      _
    $region7: #{tpu_custom_call.1} parent=1 // pred_check_branch
      %19 = sbr.rel (0) target = $region9
    $region8: #{tpu_custom_call.1} parent=1 // pred_region
      %20 = dma.done [#allocation3], 256
    $region9: #{tpu_custom_call.1} parent=1 // pred_fallthru
      _
    %v21 = vld [vmem:[#allocation2] sm:$0xff]
    %v22 = vld [vmem:[#allocation2 + $0x8] sm:$0xff]
    %vm23 = vcmp.ge.f32.partialorder %v21, 0.0
    %vm24 = vcmp.ge.f32.partialorder %v22, 0.0
    %v25 = vsel %vm23, 1, 0
    %v26 = vsel %vm24, 1, 0
    %v27 = vcvt.s32.f32 %v25
    %v28 = vcvt.s32.f32 %v26
    %29 = vst [vmem:[#allocation5] sm:$0xff] %v27
    %30 = vst [vmem:[#allocation5 + $0x8] sm:$0xff] %v28
    // Predicated region
    $region10: #{tpu_custom_call.1} parent=1 // pred_check
      _
    $region11: #{tpu_custom_call.1} parent=1 // pred_check_branch
      %32 = sbr.rel (0) target = $region13
    $region12: #{tpu_custom_call.1} parent=1 // pred_region
      %s34 = ssub.s32 256, 256
      %35 = vsyncadd [#allocation4], %s34
      %s37 = sshll.u32 [#allocation5], 4
      %s38 = int_to_ptr.vmem [resolvable:$true] %s37
      %40 = dma.vmem_to_hbm [thread:$0]  %s38, 256, %s1, [#allocation4]
    $region13: #{tpu_custom_call.1} parent=1 // pred_fallthru
      _
    // Predicated region
    $region14: #{tpu_custom_call.1} parent=1 // pred_check
      _
    $region15: #{tpu_custom_call.1} parent=1 // pred_check_branch
      %42 = sbr.rel (0) target = $region17
    $region16: #{tpu_custom_call.1} parent=1 // pred_region
      %43 = dma.done [#allocation4], 256
    $region17: #{tpu_custom_call.1} parent=1 // pred_fallthru
      _
    %44 = vsyncpa [#allocation3], 1
    %45 = vsyncpa [#allocation4], 1

</llo_original>
